<compile_context>
chip_gen: v6e
topology: v6e:2x2x1
jax: 0.10.0
libtpu: 0.0.40
codegen_flags: <defaults>
</compile_context>

<pallas_src>
import jax
import jax.numpy as jnp
from jax.experimental import pallas as pl
from jax.experimental.pallas import tpu as pltpu


# ---------------------------------------------------------------------------
# Pallas kernel: separable 3x3 blur on a reflect-padded channel block
# ---------------------------------------------------------------------------
def _blur_kernel(xp_ref, o_ref):
    # xp_ref: (BC, H+2, W+2) reflect-padded channel planes
    # o_ref : (BC, H,   W  )
    xp = xp_ref[...].astype(jnp.float32)
    # Specialized to the module's fixed registered buffer f = [1, 2, 1];
    # outer(f, f) / 16 is separable into two [1, 2, 1] passes (overall /16).
    v = xp[:, :-2, :] + 2.0 * xp[:, 1:-1, :] + xp[:, 2:, :]       # vertical   (BC, H, W+2)
    o = v[:, :, :-2] + 2.0 * v[:, :, 1:-1] + v[:, :, 2:]          # horizontal (BC, H, W)
    o_ref[...] = (o * (1.0 / 16.0)).astype(o_ref.dtype)


def _pick_block_channels(nc, h, w, budget_bytes=8 << 20):
    """Channels per grid step: keep double-buffered in+out tiles under
    `budget_bytes` and keep >= 2 grid steps so the pipeline overlaps DMA
    with compute."""
    per_ch = 2 * ((h + 2) * (w + 2) + h * w) * 4     # double-buffered in + out, f32
    bc = max(1, min(nc, budget_bytes // per_ch))
    if nc >= 2:
        bc = min(bc, max(1, nc // 2))                # at least 2 pipeline steps
    while nc % bc != 0:                              # uniform blocks only
        bc -= 1
    return bc


def blur_pallas(x):
    """filter2d(x, outer([1,2,1],[1,2,1]), normalized=True), reflect border."""
    N, C, H, W = x.shape
    nc = N * C
    xf = x.reshape(nc, H, W).astype(jnp.float32)
    xp = jnp.pad(xf, ((0, 0), (1, 1), (1, 1)), mode="reflect")    # (nc, H+2, W+2)

    bc = _pick_block_channels(nc, H, W)
    out = pl.pallas_call(
        _blur_kernel,
        out_shape=jax.ShapeDtypeStruct((nc, H, W), x.dtype),
        grid=(nc // bc,),
        in_specs=[pl.BlockSpec((bc, H + 2, W + 2), lambda i: (i, 0, 0))],
        out_specs=pl.BlockSpec((bc, H, W), lambda i: (i, 0, 0)),
        compiler_params=pltpu.CompilerParams(
            dimension_semantics=("parallel",)),
    )(xp)
    return out.reshape(N, C, H, W)


class Blur:
    """JAX port of lightweight_gan.Blur (f = [1, 2, 1] registered buffer)."""

    def __init__(self):
        self.f = jnp.array([1.0, 2.0, 1.0], dtype=jnp.float32)

    def __call__(self, x):
        # The Pallas kernel is specialized to the constant buffer value.
        return blur_pallas(x)


# ---------------------------------------------------------------------------
# Pure-JAX reference (depthwise conv) for correctness checking
# ---------------------------------------------------------------------------
def _blur_reference(x):
    f = jnp.array([1.0, 2.0, 1.0], dtype=jnp.float32)
    k2 = jnp.outer(f, f)
    k2 = k2 / jnp.sum(k2)
    N, C, H, W = x.shape
    xp = jnp.pad(x.astype(jnp.float32),
                 ((0, 0), (0, 0), (1, 1), (1, 1)), mode="reflect")
    w = jnp.broadcast_to(k2, (C, 1, 3, 3))
    y = jax.lax.conv_general_dilated(
        xp, w, window_strides=(1, 1), padding="VALID",
        feature_group_count=C,
        dimension_numbers=("NCHW", "OIHW", "NCHW"))
    return y.astype(x.dtype)


# ---------------------------------------------------------------------------
if __name__ == "__main__":
    key = jax.random.PRNGKey(0)
    N, C, H, W = 2, 4, 16, 16
    x = jax.random.normal(key, (N, C, H, W), dtype=jnp.float32)

    blur = Blur()
    out = jax.block_until_ready(blur(x))
    assert out.shape == (N, C, H, W) and out.dtype == x.dtype

    ref = jax.block_until_ready(_blur_reference(x))
    assert jnp.allclose(out, ref, atol=1e-5, rtol=1e-5), "mismatch vs reference"

    print("KERNEL_OK")
</pallas_src>

<mosaic_0001>
module attributes {stable_mosaic.version = 11 : i64} {
  func.func @_blur_kernel(%arg0: i32, %arg1: memref<4x18x18xf32, #tpu.memory_space<vmem>>, %arg2: memref<4x16x16xf32, #tpu.memory_space<vmem>>) attributes {dimension_semantics = [#tpu.dimension_semantics<parallel>], iteration_bounds = array<i64: 2>, scalar_prefetch = 0 : i64, scratch_operands = 0 : i64, tpu.core_type = #tpu.core_type<tc>, window_params = [{transform_indices = @transform_0, window_bounds = array<i64: 4, 18, 18>}, {transform_indices = @transform_1, window_bounds = array<i64: 4, 16, 16>}]} {
    %c0 = arith.constant 0 : index
    %c0_0 = arith.constant 0 : index
    %c0_1 = arith.constant 0 : index
    %0 = vector.load %arg1[%c0, %c0_0, %c0_1] : memref<4x18x18xf32, #tpu.memory_space<vmem>>, vector<4x18x18xf32>
    %1 = vector.extract_strided_slice %0 {offsets = [0, 0, 0], sizes = [4, 16, 18], strides = [1, 1, 1]} : vector<4x18x18xf32> to vector<4x16x18xf32>
    %2 = vector.extract_strided_slice %0 {offsets = [0, 1, 0], sizes = [4, 16, 18], strides = [1, 1, 1]} : vector<4x18x18xf32> to vector<4x16x18xf32>
    %cst = arith.constant 2.000000e+00 : f32
    %3 = vector.broadcast %cst : f32 to vector<4x16x18xf32>
    %4 = arith.mulf %3, %2 : vector<4x16x18xf32>
    %5 = arith.addf %1, %4 : vector<4x16x18xf32>
    %6 = vector.extract_strided_slice %0 {offsets = [0, 2, 0], sizes = [4, 16, 18], strides = [1, 1, 1]} : vector<4x18x18xf32> to vector<4x16x18xf32>
    %7 = arith.addf %5, %6 : vector<4x16x18xf32>
    %8 = vector.extract_strided_slice %7 {offsets = [0, 0, 0], sizes = [4, 16, 16], strides = [1, 1, 1]} : vector<4x16x18xf32> to vector<4x16x16xf32>
    %9 = vector.extract_strided_slice %7 {offsets = [0, 0, 1], sizes = [4, 16, 16], strides = [1, 1, 1]} : vector<4x16x18xf32> to vector<4x16x16xf32>
    %cst_2 = arith.constant 2.000000e+00 : f32
    %10 = vector.broadcast %cst_2 : f32 to vector<4x16x16xf32>
    %11 = arith.mulf %10, %9 : vector<4x16x16xf32>
    %12 = arith.addf %8, %11 : vector<4x16x16xf32>
    %13 = vector.extract_strided_slice %7 {offsets = [0, 0, 2], sizes = [4, 16, 16], strides = [1, 1, 1]} : vector<4x16x18xf32> to vector<4x16x16xf32>
    %14 = arith.addf %12, %13 : vector<4x16x16xf32>
    %cst_3 = arith.constant 6.250000e-02 : f32
    %15 = vector.broadcast %cst_3 : f32 to vector<4x16x16xf32>
    %16 = arith.mulf %14, %15 : vector<4x16x16xf32>
    %c0_4 = arith.constant 0 : index
    %c0_5 = arith.constant 0 : index
    %c0_6 = arith.constant 0 : index
    %17 = vector.load %arg2[%c0_4, %c0_5, %c0_6] : memref<4x16x16xf32, #tpu.memory_space<vmem>>, vector<4x16x16xf32>
    tpu.vector_store %arg2[%c0_4, %c0_5, %c0_6], %16 {strides = array<i32>} : memref<4x16x16xf32, #tpu.memory_space<vmem>>, vector<4x16x16xf32>,
    return
  }
  func.func @transform_0(%arg0: i32) -> (i32, i32, i32) {
    %c0_i32 = arith.constant 0 : i32
    %c0_i32_0 = arith.constant 0 : i32
    %c0_i32_1 = arith.constant 0 : i32
    return %arg0, %c0_i32, %c0_i32_0 : i32, i32, i32
  }
  func.func @transform_1(%arg0: i32) -> (i32, i32, i32) {
    %c0_i32 = arith.constant 0 : i32
    %c0_i32_0 = arith.constant 0 : i32
    %c0_i32_1 = arith.constant 0 : i32
    return %arg0, %c0_i32, %c0_i32_0 : i32, i32, i32
  }
}

</mosaic_0001>

<llo_original>
// kernel: tpu_custom_call.1
$region0: #{tpu_custom_call.1}
  #allocation0 [shape = 'u32[]', space=smem, size = 0x4, offset = 0x4, fixed_abs, tag = 'smem constant byte address 0x4 - core index']
  #allocation1 [shape = 'u32[144,128]{1,0:T(1,128)}', space=vmem, size = 0x12000, scoped, tag = 'internal scratch']
  %s0 = inlined_call_operand.vmem [shape: f32[8,18,18], index: 0, kind: input, shape index: {}]
  %s1 = inlined_call_operand.hbm [shape: f32[8,16,16], index: 1, kind: output, shape index: {}]
  %s2 = sld [smem:[#allocation0]]
  $region37: #{tpu_custom_call.1} parent=0
    _
  %s4 = ssub.s32 1, %s2
  %s5 = scalar_select 0, %s4, %s2
  $region1: #{tpu_custom_call.1} parent=0
    #allocation2 [shape = 'u8[65536]{0}', space=vmem, size = 0x10000, scoped, tag = 'output window, operand 0']
    #allocation3 [shape = 's32[2]{0}', space=sflag, size = 0x8, scoped, tag = 'scoped memory for tpu_custom_call.1']
    %6 = vsyncpa [#allocation3], 0
    %s7 = scalar_lea.sflag [#allocation3], 1
    %8 = vsyncpa %s7, 0
    loop: start=0, step=1, limit=4
    $region2: #{tpu_custom_call.1} parent=1 // loop_pre_header
      _
    $region3: #{tpu_custom_call.1} parent=1 // loop_header
      %s10 = sphi 0, %s14
      %p11 = scmp.ge.s32.totalorder %s10, 4
      %s20 = sphi 0, %s22
      %s23 = sphi 0, %s20
      %s24 = sphi 0, %s23
      %s40 = sphi 0, %s24
      %s46 = sphi 0, %s48
      %s49 = sphi 0, %s46
      %s50 = sphi 0, %s49
      %s66 = sphi 0, %s50
    $region4: #{tpu_custom_call.1} parent=1 // loop_header_branch
      %13 = sbr.rel (%p11) target = $region8
    $region5: #{tpu_custom_call.1} parent=1 // loop_body
      %s15 = ssub.s32 %s10, 1
      %s16 = ssub.s32 %s10, 2
      %s17 = sadd.s32 %s10, 1
      %s18 = ssub.s32 %s10, %s17
      %p19 = scmp.eq.s32.totalorder %s18, 0
      %s21 = sadd.s32 %s20, 1
      %s22 = scalar_select %p19, %s20, %s21
      %p25 = pneg %p19
      %p26 = scmp.eq.s32.totalorder %s10, 1
      %p27 = por %p25, %p26
      %p28 = scmp.ne.s32.totalorder %s20, %s23
      %p29 = scmp.eq.s32.totalorder %s10, 0
      %p30 = por %p28, %p29
      %p31 = scmp.ne.s32.totalorder %s20, %s23
      %p32 = scmp.eq.s32.totalorder %s15, 1
      %p33 = por %p31, %p32
      %p34 = scmp.ne.s32.totalorder %s23, %s24
      %p35 = scmp.eq.s32.totalorder %s15, 0
      %p36 = por %p34, %p35
      %p37 = scmp.ne.s32.totalorder %s23, %s24
      %p38 = scmp.eq.s32.totalorder %s16, 1
      %p39 = por %p37, %p38
      %p41 = scmp.ne.s32.totalorder %s24, %s40
      %p42 = scmp.eq.s32.totalorder %s16, 0
      %p43 = por %p41, %p42
      %s44 = ssub.s32 %s10, %s17
      %p45 = scmp.eq.s32.totalorder %s44, 0
      %s47 = sadd.s32 %s46, 1
      %s48 = scalar_select %p45, %s46, %s47
      %p51 = pneg %p45
      %p52 = scmp.eq.s32.totalorder %s10, 1
      %p53 = por %p51, %p52
      %p54 = scmp.ne.s32.totalorder %s46, %s49
      %p55 = scmp.eq.s32.totalorder %s10, 0
      %p56 = por %p54, %p55
      %p57 = scmp.ne.s32.totalorder %s46, %s49
      %p58 = scmp.eq.s32.totalorder %s15, 1
      %p59 = por %p57, %p58
      %p60 = scmp.ne.s32.totalorder %s49, %s50
      %p61 = scmp.eq.s32.totalorder %s15, 0
      %p62 = por %p60, %p61
      %p63 = scmp.ne.s32.totalorder %s49, %s50
      %p64 = scmp.eq.s32.totalorder %s16, 1
      %p65 = por %p63, %p64
      %p67 = scmp.ne.s32.totalorder %s50, %s66
      %p68 = scmp.eq.s32.totalorder %s16, 0
      %p69 = por %p67, %p68
      %p70 = scmp.le.s32.totalorder 1, %s10
      %p71 = scmp.lt.s32.totalorder %s10, 3
      %p72 = pnand %p70, %p71
      %p73 = pneg %p72
      // Predicated region
      $region9: #{tpu_custom_call.1} parent=5 // pred_check
        _
      $region10: #{tpu_custom_call.1} parent=5 // pred_check_branch
        %75 = sbr.rel (%p72) target = $region12
      $region11: #{tpu_custom_call.1} parent=5 // pred_region
        %s76 = ssub.s32 %s10, 1
      $region12: #{tpu_custom_call.1} parent=5 // pred_fallthru
        _
      %p77 = scmp.lt.s32.totalorder %s10, 2
      // Predicated region
      $region13: #{tpu_custom_call.1} parent=5 // pred_check
        %p78 = pneg %p77
      $region14: #{tpu_custom_call.1} parent=5 // pred_check_branch
        %80 = sbr.rel (%p78) target = $region16
      $region15: #{tpu_custom_call.1} parent=5 // pred_region
        // Predicated region
        $region17: #{tpu_custom_call.1} parent=15 // pred_check
          %p81 = pneg %p30
        $region18: #{tpu_custom_call.1} parent=15 // pred_check_branch
          %83 = sbr.rel (%p81) target = $region20
        $region19: #{tpu_custom_call.1} parent=15 // pred_region
          %s84 = smul.u32 4, %s10
          %p85 = scmp.lt.s32.totalorder %s84, 7
          %s86 = scalar_select %p85, %s84, 7
          %s87 = smul.addr %s86, 3
          %s88 = smul.addr %s87, 8
          %s89 = scalar_lea.vmem %s0, %s88
          %s90 = smul.u32 4, %s10
        $region20: #{tpu_custom_call.1} parent=15 // pred_fallthru
          _
      $region16: #{tpu_custom_call.1} parent=5 // pred_fallthru
        _
      %p91 = scmp.le.s32.totalorder 1, %s10
      %p92 = scmp.lt.s32.totalorder %s10, 3
      %p93 = pnand %p91, %p92
      %p94 = pneg %p93
      // Predicated region
      $region21: #{tpu_custom_call.1} parent=5 // pred_check
        _
      $region22: #{tpu_custom_call.1} parent=5 // pred_check_branch
        %96 = sbr.rel (%p93) target = $region24
      $region23: #{tpu_custom_call.1} parent=5 // pred_region
        %s97 = ssub.s32 %s10, 1
        %s98 = smul.u32 4, %s15
        %p99 = scmp.lt.s32.totalorder %s98, 7
        %s100 = scalar_select %p99, %s98, 7
        %s101 = smul.addr %s100, 3
        %s102 = smul.addr %s101, 8
        %s103 = scalar_lea.vmem %s0, %s102
        %p104 = pneg %p36
        %p105 = pneg %p33
        %p106 = pneg %p62
        %p107 = pneg %p59
        %s108 = sand.u32 %s49, 1
        %s109 = scalar_lea.sflag [#allocation3], %s108
        %s110 = sand.u32 %s49, 1
        %s111 = smul.addr %s110, 64
        %s112 = scalar_lea.vmem [#allocation2], %s111
        %s113 = smul.u32 4, %s15
        %p114 = scmp.lt.s32.totalorder %s113, 7
        %s115 = scalar_select %p114, %s113, 7
        %s116 = smul.addr %s115, 3
        %s117 = smul.addr %s116, 8
        %s118 = scalar_lea.vmem %s0, %s117
        %s119 = smul.u32 4, %s15
        %s120 = smul.u32 4, %s15
        %v121 = vld [vmem:[%s118] sm:$0xff]
        %v122 = vld [vmem:[%s118 + $0x8] sm:$0xff]
        %v123 = vld [vmem:[%s118 + $0x10] sm:$0x3]
        %v124 = vld [vmem:[%s118 + $0x18] sm:$0xff]
        %v125 = vld [vmem:[%s118 + $0x20] sm:$0xff]
        %v126 = vld [vmem:[%s118 + $0x28] sm:$0x3]
        %v127 = vld [vmem:[%s118 + $0x30] sm:$0xff]
        %v128 = vld [vmem:[%s118 + $0x38] sm:$0xff]
        %v129 = vld [vmem:[%s118 + $0x40] sm:$0x3]
        %v130 = vld [vmem:[%s118 + $0x48] sm:$0xff]
        %v131 = vld [vmem:[%s118 + $0x50] sm:$0xff]
        %v132 = vld [vmem:[%s118 + $0x58] sm:$0x3]
        %v133 = vmul.f32 %v121, 2.0
        %v134 = vmul.f32 %v122, 2.0
        %v135 = vmul.f32 %v123, 2.0
        %v136 = vmul.f32 %v124, 2.0
        %v137 = vmul.f32 %v125, 2.0
        %v138 = vmul.f32 %v126, 2.0
        %v139 = vmul.f32 %v127, 2.0
        %v140 = vmul.f32 %v128, 2.0
        %v141 = vmul.f32 %v129, 2.0
        %v142 = vmul.f32 %v130, 2.0
        %v143 = vmul.f32 %v131, 2.0
        %v144 = vmul.f32 %v132, 2.0
        %vm157 = vcmask 1046528
        %v158 = vrot.slane %v133, 1
        %v159 = vrot.slane %v134, 1
        %v160 = vsel %vm157, %v158, %v159
        %v161 = vrot.slane %v135, 1
        %v162 = vsel %vm157, %v159, %v161
        %v163 = vrot.slane %v136, 1
        %v164 = vrot.slane %v137, 1
        %v165 = vsel %vm157, %v163, %v164
        %v166 = vrot.slane %v138, 1
        %v167 = vsel %vm157, %v164, %v166
        %v168 = vrot.slane %v139, 1
        %v169 = vrot.slane %v140, 1
        %v170 = vsel %vm157, %v168, %v169
        %v171 = vrot.slane %v141, 1
        %v172 = vsel %vm157, %v169, %v171
        %v173 = vrot.slane %v142, 1
        %v174 = vrot.slane %v143, 1
        %v175 = vsel %vm157, %v173, %v174
        %v176 = vrot.slane %v144, 1
        %v177 = vsel %vm157, %v174, %v176
        %v186 = vadd.f32 %v121, %v160
        %v187 = vadd.f32 %v122, %v162
        %v188 = vadd.f32 %v124, %v165
        %v189 = vadd.f32 %v125, %v167
        %v190 = vadd.f32 %v127, %v170
        %v191 = vadd.f32 %v128, %v172
        %v192 = vadd.f32 %v130, %v175
        %v193 = vadd.f32 %v131, %v177
        %vm206 = vcmask 1045504
        %v207 = vrot.slane %v121, 2
        %v208 = vrot.slane %v122, 2
        %v209 = vsel %vm206, %v207, %v208
        %v210 = vrot.slane %v123, 2
        %v211 = vsel %vm206, %v208, %v210
        %v212 = vrot.slane %v124, 2
        %v213 = vrot.slane %v125, 2
        %v214 = vsel %vm206, %v212, %v213
        %v215 = vrot.slane %v126, 2
        %v216 = vsel %vm206, %v213, %v215
        %v217 = vrot.slane %v127, 2
        %v218 = vrot.slane %v128, 2
        %v219 = vsel %vm206, %v217, %v218
        %v220 = vrot.slane %v129, 2
        %v221 = vsel %vm206, %v218, %v220
        %v222 = vrot.slane %v130, 2
        %v223 = vrot.slane %v131, 2
        %v224 = vsel %vm206, %v222, %v223
        %v225 = vrot.slane %v132, 2
        %v226 = vsel %vm206, %v223, %v225
        %v235 = vadd.f32 %v186, %v209
        %v236 = vadd.f32 %v187, %v211
        %v237 = vadd.f32 %v188, %v214
        %v238 = vadd.f32 %v189, %v216
        %v239 = vadd.f32 %v190, %v219
        %v240 = vadd.f32 %v191, %v221
        %v241 = vadd.f32 %v192, %v224
        %v242 = vadd.f32 %v193, %v226
        %v243 = vmul.f32 %v235, 2.0
        %v244 = vmul.f32 %v236, 2.0
        %v245 = vmul.f32 %v237, 2.0
        %v246 = vmul.f32 %v238, 2.0
        %v247 = vmul.f32 %v239, 2.0
        %v248 = vmul.f32 %v240, 2.0
        %v249 = vmul.f32 %v241, 2.0
        %v250 = vmul.f32 %v242, 2.0
        %259 = vrot.lane.b32.xlu0 %v243, 127
        %v260 = vpop.permute.xlu0 %259
        %261 = vrot.lane.b32.xlu0 %v244, 127
        %v262 = vpop.permute.xlu0 %261
        %263 = vrot.lane.b32.xlu0 %v245, 127
        %v264 = vpop.permute.xlu0 %263
        %265 = vrot.lane.b32.xlu0 %v246, 127
        %v266 = vpop.permute.xlu0 %265
        %267 = vrot.lane.b32.xlu0 %v247, 127
        %v268 = vpop.permute.xlu0 %267
        %269 = vrot.lane.b32.xlu0 %v248, 127
        %v270 = vpop.permute.xlu0 %269
        %271 = vrot.lane.b32.xlu0 %v249, 127
        %v272 = vpop.permute.xlu0 %271
        %273 = vrot.lane.b32.xlu0 %v250, 127
        %v274 = vpop.permute.xlu0 %273
        %v283 = vadd.f32 %v235, %v260
        %v284 = vadd.f32 %v236, %v262
        %v285 = vadd.f32 %v237, %v264
        %v286 = vadd.f32 %v238, %v266
        %v287 = vadd.f32 %v239, %v268
        %v288 = vadd.f32 %v240, %v270
        %v289 = vadd.f32 %v241, %v272
        %v290 = vadd.f32 %v242, %v274
        %299 = vrot.lane.b32.xlu0 %v235, 126
        %v300 = vpop.permute.xlu0 %299
        %301 = vrot.lane.b32.xlu0 %v236, 126
        %v302 = vpop.permute.xlu0 %301
        %303 = vrot.lane.b32.xlu0 %v237, 126
        %v304 = vpop.permute.xlu0 %303
        %305 = vrot.lane.b32.xlu0 %v238, 126
        %v306 = vpop.permute.xlu0 %305
        %307 = vrot.lane.b32.xlu0 %v239, 126
        %v308 = vpop.permute.xlu0 %307
        %309 = vrot.lane.b32.xlu0 %v240, 126
        %v310 = vpop.permute.xlu0 %309
        %311 = vrot.lane.b32.xlu0 %v241, 126
        %v312 = vpop.permute.xlu0 %311
        %313 = vrot.lane.b32.xlu0 %v242, 126
        %v314 = vpop.permute.xlu0 %313
        %v323 = vadd.f32 %v283, %v300
        %v324 = vadd.f32 %v284, %v302
        %v325 = vadd.f32 %v285, %v304
        %v326 = vadd.f32 %v286, %v306
        %v327 = vadd.f32 %v287, %v308
        %v328 = vadd.f32 %v288, %v310
        %v329 = vadd.f32 %v289, %v312
        %v330 = vadd.f32 %v290, %v314
        %v331 = vmul.f32 %v323, 0.0625
        %v332 = vmul.f32 %v324, 0.0625
        %v333 = vmul.f32 %v325, 0.0625
        %v334 = vmul.f32 %v326, 0.0625
        %v335 = vmul.f32 %v327, 0.0625
        %v336 = vmul.f32 %v328, 0.0625
        %v337 = vmul.f32 %v329, 0.0625
        %v338 = vmul.f32 %v330, 0.0625
        %vm339 = vcmask 130048
        %340 = vst.msk [vmem:[%s112] sm:$0xff] %vm339, %v331
        %341 = vst.msk [vmem:[%s112 + $0x8] sm:$0xff] %vm339, %v332
        %342 = vst.msk [vmem:[%s112 + $0x10] sm:$0xff] %vm339, %v333
        %343 = vst.msk [vmem:[%s112 + $0x18] sm:$0xff] %vm339, %v334
        %344 = vst.msk [vmem:[%s112 + $0x20] sm:$0xff] %vm339, %v335
        %345 = vst.msk [vmem:[%s112 + $0x28] sm:$0xff] %vm339, %v336
        %346 = vst.msk [vmem:[%s112 + $0x30] sm:$0xff] %vm339, %v337
        %347 = vst.msk [vmem:[%s112 + $0x38] sm:$0xff] %vm339, %v338
        %s348 = sand.u32 %s49, 1
        %s349 = scalar_lea.sflag [#allocation3], %s348
        %s350 = sand.u32 %s49, 1
        %s351 = smul.addr %s350, 64
        %s352 = scalar_lea.vmem [#allocation2], %s351
        // Predicated region
        $region25: #{tpu_custom_call.1} parent=23 // pred_check
          %p353 = pneg %p59
        $region26: #{tpu_custom_call.1} parent=23 // pred_check_branch
          %355 = sbr.rel (%p353) target = $region28
        $region27: #{tpu_custom_call.1} parent=23 // pred_region
          %s356 = smul.u32 4, %s15
          %s358 = ssub.s32 1024, 1024
          %359 = vsyncadd %s349, %s358
          %s360 = smul.addr %s356, 2
          %s361 = smul.addr %s360, 128
          %s362 = scalar_lea.hbm %s1, %s361
          %s363 = sshll.u32 %s352, 4
          %s364 = int_to_ptr.vmem [resolvable:$true] %s363
          %369 = dma.vmem_to_hbm [thread:$0]  %s364, 1024, %s362, %s349, 128, 128, 8
        $region28: #{tpu_custom_call.1} parent=23 // pred_fallthru
          _
      $region24: #{tpu_custom_call.1} parent=5 // pred_fallthru
        _
      %p370 = scmp.le.s32.totalorder 2, %s10
      // Predicated region
      $region29: #{tpu_custom_call.1} parent=5 // pred_check
        %p371 = pneg %p370
      $region30: #{tpu_custom_call.1} parent=5 // pred_check_branch
        %373 = sbr.rel (%p371) target = $region32
      $region31: #{tpu_custom_call.1} parent=5 // pred_region
        %s374 = ssub.s32 %s10, 2
        // Predicated region
        $region33: #{tpu_custom_call.1} parent=31 // pred_check
          %p375 = pneg %p65
        $region34: #{tpu_custom_call.1} parent=31 // pred_check_branch
          %377 = sbr.rel (%p375) target = $region36
        $region35: #{tpu_custom_call.1} parent=31 // pred_region
          %s378 = sand.u32 %s50, 1
          %s379 = scalar_lea.sflag [#allocation3], %s378
          %s380 = sand.u32 %s50, 1
          %s381 = smul.addr %s380, 64
          %s382 = scalar_lea.vmem [#allocation2], %s381
          %383 = dma.done %s379, 1024
        $region36: #{tpu_custom_call.1} parent=31 // pred_fallthru
          _
      $region32: #{tpu_custom_call.1} parent=5 // pred_fallthru
        _
    $region6: #{tpu_custom_call.1} parent=1 // loop_footer
      %s14 = sadd.s32 1, %s10
    $region7: #{tpu_custom_call.1} parent=1 // loop_footer_branch
      %9 = sbr.rel target = $region3
    $region8: #{tpu_custom_call.1} parent=1 // loop_exit
      _
    %384 = vsyncpa [#allocation3], 1
    %s385 = scalar_lea.sflag [#allocation3], 1
    %386 = vsyncpa %s385, 1

</llo_original>
